<compile_context>
chip_gen: v7x
topology: tpu7x:2x2x1
jax: 0.10.0
libtpu: 0.0.40
codegen_flags: <defaults>
</compile_context>

<pallas_src>
import functools

import jax
import jax.numpy as jnp
from jax.experimental import pallas as pl
from jax.experimental.pallas import tpu as pltpu

HIDDEN = 256


def _round_up(n: int, m: int) -> int:
    return ((n + m - 1) // m) * m


def actor_kernel(x_ref, w1_ref, b1_ref, w2_ref, b2_ref, wh_ref, bh_ref,
                 out_ref, *, action_dim):
    # fc1 + ReLU  (matmul inputs in weight dtype, accumulate + VPU work in f32)
    h1 = jnp.dot(x_ref[...], w1_ref[...], preferred_element_type=jnp.float32)
    h1 = jnp.maximum(h1 + b1_ref[...], 0.0)

    # fc2 + ReLU
    h2 = jnp.dot(h1.astype(w2_ref.dtype), w2_ref[...],
                 preferred_element_type=jnp.float32)
    h2 = jnp.maximum(h2 + b2_ref[...], 0.0)

    # Fused heads: lanes [0, A) = mu, lanes [A, 2A) = log_std, rest = padding.
    head = jnp.dot(h2.astype(wh_ref.dtype), wh_ref[...],
                   preferred_element_type=jnp.float32)
    head = head + bh_ref[...]

    # Clip only the log_std lanes; single VPU select, one lane-dense store.
    lane = jax.lax.broadcasted_iota(jnp.int32, head.shape, 1)
    is_log_std = (lane >= action_dim) & (lane < 2 * action_dim)
    out_ref[...] = jnp.where(is_log_std, jnp.clip(head, -20.0, 2.0),
                             head).astype(out_ref.dtype)


def actor_forward(x, params, *, compute_dtype=jnp.bfloat16, block_m=128):
    """x: [batch, state_dim] -> (mu [batch, action_dim], log_std [batch, action_dim])."""
    w1, b1, w2, b2, wmu, bmu, wls, bls = params
    batch, state_dim = x.shape
    hidden = w1.shape[1]
    action_dim = wmu.shape[1]

    # --- Fuse + lane-pad the two heads into one [hidden, >=128] weight ----------
    head_out = 2 * action_dim
    head_pad = max(128, _round_up(head_out, 128))
    wh = jnp.pad(jnp.concatenate([wmu, wls], axis=1),
                 ((0, 0), (0, head_pad - head_out)))
    bh = jnp.pad(jnp.concatenate([bmu, bls], axis=1),
                 ((0, 0), (0, head_pad - head_out)))

    # --- Batch tiling: tm rows per grid step, weights VMEM-resident -------------
    tm = min(block_m, _round_up(batch, 16))
    padded_b = _round_up(batch, tm)
    xp = x if padded_b == batch else jnp.pad(x, ((0, padded_b - batch), (0, 0)))

    # bf16 MXU inputs, f32 biases / elementwise / accumulation.
    xp = xp.astype(compute_dtype)
    w1c, w2c, whc = (w.astype(compute_dtype) for w in (w1, w2, wh))
    b1f, b2f, bhf = (b.astype(jnp.float32) for b in (b1, b2, bh))

    grid = (padded_b // tm,)

    flops = 2 * padded_b * (state_dim * hidden + hidden * hidden + hidden * head_pad)
    bytes_accessed = (
        xp.size * xp.dtype.itemsize
        + sum(a.size * a.dtype.itemsize for a in (w1c, b1f, w2c, b2f, whc, bhf))
        + padded_b * head_pad * 4)

    def resident(a):  # full-array block, same block index for every grid step
        return pl.BlockSpec(a.shape, lambda i: (0, 0))

    out = pl.pallas_call(
        functools.partial(actor_kernel, action_dim=action_dim),
        out_shape=jax.ShapeDtypeStruct((padded_b, head_pad), jnp.float32),
        grid=grid,
        in_specs=[
            pl.BlockSpec((tm, state_dim), lambda i: (i, 0)),
            resident(w1c), resident(b1f),
            resident(w2c), resident(b2f),
            resident(whc), resident(bhf),
        ],
        out_specs=pl.BlockSpec((tm, head_pad), lambda i: (i, 0)),
        compiler_params=pltpu.CompilerParams(
            dimension_semantics=("parallel",)),
        cost_estimate=pl.CostEstimate(flops=flops, transcendentals=0,
                                      bytes_accessed=bytes_accessed),
    )(xp, w1c, b1f, w2c, b2f, whc, bhf)

    mu = out[:batch, :action_dim]
    log_std = out[:batch, action_dim:head_out]
    return mu, log_std


def init_actor_params(key, state_dim, action_dim):
    """PyTorch nn.Linear-style init (U[-1/sqrt(fan_in), 1/sqrt(fan_in)]), weights [in, out]."""
    def linear(k, fan_in, fan_out):
        kw, kb = jax.random.split(k)
        bound = 1.0 / jnp.sqrt(jnp.float32(fan_in))
        w = jax.random.uniform(kw, (fan_in, fan_out), jnp.float32, -bound, bound)
        b = jax.random.uniform(kb, (1, fan_out), jnp.float32, -bound, bound)
        return w, b

    k1, k2, k3, k4 = jax.random.split(key, 4)
    w1, b1 = linear(k1, state_dim, HIDDEN)
    w2, b2 = linear(k2, HIDDEN, HIDDEN)
    wmu, bmu = linear(k3, HIDDEN, action_dim)
    wls, bls = linear(k4, HIDDEN, action_dim)
    return (w1, b1, w2, b2, wmu, bmu, wls, bls)


def actor_reference(x, params, compute_dtype=jnp.bfloat16):
    """Pure-JAX reference mirroring the kernel's bf16-at-MXU / f32-elsewhere casts."""
    w1, b1, w2, b2, wmu, bmu, wls, bls = params
    cd = compute_dtype
    h1 = jnp.maximum(jnp.dot(x.astype(cd), w1.astype(cd),
                             preferred_element_type=jnp.float32) + b1, 0.0)
    h2 = jnp.maximum(jnp.dot(h1.astype(cd), w2.astype(cd),
                             preferred_element_type=jnp.float32) + b2, 0.0)
    mu = jnp.dot(h2.astype(cd), wmu.astype(cd),
                 preferred_element_type=jnp.float32) + bmu
    ls = jnp.dot(h2.astype(cd), wls.astype(cd),
                 preferred_element_type=jnp.float32) + bls
    return mu, jnp.clip(ls, -20.0, 2.0)


def _check(batch, state_dim, action_dim, seed):
    key = jax.random.PRNGKey(seed)
    kx, kp = jax.random.split(key)
    x = jax.random.normal(kx, (batch, state_dim), jnp.float32)
    params = init_actor_params(kp, state_dim, action_dim)

    mu, log_std = actor_forward(x, params)
    jax.block_until_ready((mu, log_std))

    mu_ref, log_std_ref = actor_reference(x, params)
    assert mu.shape == (batch, action_dim)
    assert log_std.shape == (batch, action_dim)
    assert jnp.allclose(mu, mu_ref, atol=2e-3, rtol=2e-3)
    assert jnp.allclose(log_std, log_std_ref, atol=2e-3, rtol=2e-3)
    assert jnp.all(log_std <= 2.0) and jnp.all(log_std >= -20.0)


if __name__ == "__main__":
    # Small inference-style batch (single grid step) ...
    _check(batch=8, state_dim=16, action_dim=4, seed=0)
    # ... and a training-style batch that exercises the batch grid + padding.
    _check(batch=200, state_dim=16, action_dim=4, seed=1)
    print("KERNEL_OK")
</pallas_src>

<mosaic_0001>
module attributes {stable_mosaic.version = 11 : i64} {
  func.func @actor_kernel(%arg0: i32, %arg1: memref<16x16xbf16, #tpu.memory_space<vmem>>, %arg2: memref<16x256xbf16, #tpu.memory_space<vmem>>, %arg3: memref<1x256xf32, #tpu.memory_space<vmem>>, %arg4: memref<256x256xbf16, #tpu.memory_space<vmem>>, %arg5: memref<1x256xf32, #tpu.memory_space<vmem>>, %arg6: memref<256x128xbf16, #tpu.memory_space<vmem>>, %arg7: memref<1x128xf32, #tpu.memory_space<vmem>>, %arg8: memref<16x128xf32, #tpu.memory_space<vmem>>) attributes {dimension_semantics = [#tpu.dimension_semantics<parallel>], iteration_bounds = array<i64: 1>, scalar_prefetch = 0 : i64, scratch_operands = 0 : i64, tpu.core_type = #tpu.core_type<tc>, window_params = [{transform_indices = @transform_0, window_bounds = array<i64: 16, 16>}, {pipeline_mode = #tpu.pipeline_mode<synchronous>, transform_indices = @transform_1, window_bounds = array<i64: 16, 256>}, {pipeline_mode = #tpu.pipeline_mode<synchronous>, transform_indices = @transform_2, window_bounds = array<i64: 1, 256>}, {pipeline_mode = #tpu.pipeline_mode<synchronous>, transform_indices = @transform_3, window_bounds = array<i64: 256, 256>}, {pipeline_mode = #tpu.pipeline_mode<synchronous>, transform_indices = @transform_4, window_bounds = array<i64: 1, 256>}, {pipeline_mode = #tpu.pipeline_mode<synchronous>, transform_indices = @transform_5, window_bounds = array<i64: 256, 128>}, {pipeline_mode = #tpu.pipeline_mode<synchronous>, transform_indices = @transform_6, window_bounds = array<i64: 1, 128>}, {transform_indices = @transform_7, window_bounds = array<i64: 16, 128>}]} {
    %c0 = arith.constant 0 : index
    %c0_0 = arith.constant 0 : index
    %0 = vector.load %arg1[%c0, %c0_0] : memref<16x16xbf16, #tpu.memory_space<vmem>>, vector<16x16xbf16>
    %c0_1 = arith.constant 0 : index
    %c0_2 = arith.constant 0 : index
    %1 = vector.load %arg2[%c0_1, %c0_2] : memref<16x256xbf16, #tpu.memory_space<vmem>>, vector<16x256xbf16>
    %cst = arith.constant dense<0.000000e+00> : vector<16x256xf32>
    %2 = tpu.matmul %0, %1, %cst {dimension_numbers = #tpu.dot_dimension_numbers<[1], [0], [0], [1], [0, 0, 1, 1], [], []>} : vector<16x16xbf16>, vector<16x256xbf16>, vector<16x256xf32> -> vector<16x256xf32>
    %c0_3 = arith.constant 0 : index
    %c0_4 = arith.constant 0 : index
    %3 = vector.load %arg3[%c0_3, %c0_4] : memref<1x256xf32, #tpu.memory_space<vmem>>, vector<1x256xf32>
    %4 = vector.broadcast %3 : vector<1x256xf32> to vector<16x256xf32>
    %5 = arith.addf %2, %4 : vector<16x256xf32>
    %cst_5 = arith.constant 0.000000e+00 : f32
    %6 = vector.broadcast %cst_5 : f32 to vector<16x256xf32>
    %7 = arith.maximumf %5, %6 : vector<16x256xf32>
    %8 = arith.truncf %7 : vector<16x256xf32> to vector<16x256xbf16>
    %c0_6 = arith.constant 0 : index
    %c0_7 = arith.constant 0 : index
    %9 = vector.load %arg4[%c0_6, %c0_7] : memref<256x256xbf16, #tpu.memory_space<vmem>>, vector<256x256xbf16>
    %cst_8 = arith.constant dense<0.000000e+00> : vector<16x256xf32>
    %10 = tpu.matmul %8, %9, %cst_8 {dimension_numbers = #tpu.dot_dimension_numbers<[1], [0], [0], [1], [0, 0, 1, 1], [], []>} : vector<16x256xbf16>, vector<256x256xbf16>, vector<16x256xf32> -> vector<16x256xf32>
    %c0_9 = arith.constant 0 : index
    %c0_10 = arith.constant 0 : index
    %11 = vector.load %arg5[%c0_9, %c0_10] : memref<1x256xf32, #tpu.memory_space<vmem>>, vector<1x256xf32>
    %12 = vector.broadcast %11 : vector<1x256xf32> to vector<16x256xf32>
    %13 = arith.addf %10, %12 : vector<16x256xf32>
    %cst_11 = arith.constant 0.000000e+00 : f32
    %14 = vector.broadcast %cst_11 : f32 to vector<16x256xf32>
    %15 = arith.maximumf %13, %14 : vector<16x256xf32>
    %16 = arith.truncf %15 : vector<16x256xf32> to vector<16x256xbf16>
    %c0_12 = arith.constant 0 : index
    %c0_13 = arith.constant 0 : index
    %17 = vector.load %arg6[%c0_12, %c0_13] : memref<256x128xbf16, #tpu.memory_space<vmem>>, vector<256x128xbf16>
    %cst_14 = arith.constant dense<0.000000e+00> : vector<16x128xf32>
    %18 = tpu.matmul %16, %17, %cst_14 {dimension_numbers = #tpu.dot_dimension_numbers<[1], [0], [0], [1], [0, 0, 1, 1], [], []>} : vector<16x256xbf16>, vector<256x128xbf16>, vector<16x128xf32> -> vector<16x128xf32>
    %c0_15 = arith.constant 0 : index
    %c0_16 = arith.constant 0 : index
    %19 = vector.load %arg7[%c0_15, %c0_16] : memref<1x128xf32, #tpu.memory_space<vmem>>, vector<1x128xf32>
    %20 = vector.broadcast %19 : vector<1x128xf32> to vector<16x128xf32>
    %21 = arith.addf %18, %20 : vector<16x128xf32>
    %22 = tpu.iota {dimensions = array<i32: 1>} : vector<16x128xi32>
    %c4_i32 = arith.constant 4 : i32
    %23 = vector.broadcast %c4_i32 : i32 to vector<16x128xi32>
    %24 = arith.cmpi sge, %22, %23 : vector<16x128xi32>
    %c8_i32 = arith.constant 8 : i32
    %25 = vector.broadcast %c8_i32 : i32 to vector<16x128xi32>
    %26 = arith.cmpi slt, %22, %25 : vector<16x128xi32>
    %27 = arith.andi %24, %26 : vector<16x128xi1>
    %cst_17 = arith.constant -2.000000e+01 : f32
    %cst_18 = arith.constant 2.000000e+00 : f32
    %28 = vector.broadcast %cst_17 : f32 to vector<16x128xf32>
    %29 = arith.maximumf %28, %21 : vector<16x128xf32>
    %30 = vector.broadcast %cst_18 : f32 to vector<16x128xf32>
    %31 = arith.minimumf %30, %29 : vector<16x128xf32>
    %32 = arith.select %27, %31, %21 : vector<16x128xi1>, vector<16x128xf32>
    %c0_19 = arith.constant 0 : index
    %c0_20 = arith.constant 0 : index
    %33 = vector.load %arg8[%c0_19, %c0_20] : memref<16x128xf32, #tpu.memory_space<vmem>>, vector<16x128xf32>
    tpu.vector_store %arg8[%c0_19, %c0_20], %32 {strides = array<i32>} : memref<16x128xf32, #tpu.memory_space<vmem>>, vector<16x128xf32>,
    return
  }
  func.func @transform_0(%arg0: i32) -> (i32, i32) {
    %c0_i32 = arith.constant 0 : i32
    %c0_i32_0 = arith.constant 0 : i32
    return %arg0, %c0_i32 : i32, i32
  }
  func.func @transform_1(%arg0: i32) -> (i32, i32) {
    %c0_i32 = arith.constant 0 : i32
    %c0_i32_0 = arith.constant 0 : i32
    %c0_i32_1 = arith.constant 0 : i32
    return %c0_i32, %c0_i32_0 : i32, i32
  }
  func.func @transform_2(%arg0: i32) -> (i32, i32) {
    %c0_i32 = arith.constant 0 : i32
    %c0_i32_0 = arith.constant 0 : i32
    %c0_i32_1 = arith.constant 0 : i32
    return %c0_i32, %c0_i32_0 : i32, i32
  }
  func.func @transform_3(%arg0: i32) -> (i32, i32) {
    %c0_i32 = arith.constant 0 : i32
    %c0_i32_0 = arith.constant 0 : i32
    %c0_i32_1 = arith.constant 0 : i32
    return %c0_i32, %c0_i32_0 : i32, i32
  }
  func.func @transform_4(%arg0: i32) -> (i32, i32) {
    %c0_i32 = arith.constant 0 : i32
    %c0_i32_0 = arith.constant 0 : i32
    %c0_i32_1 = arith.constant 0 : i32
    return %c0_i32, %c0_i32_0 : i32, i32
  }
  func.func @transform_5(%arg0: i32) -> (i32, i32) {
    %c0_i32 = arith.constant 0 : i32
    %c0_i32_0 = arith.constant 0 : i32
    %c0_i32_1 = arith.constant 0 : i32
    return %c0_i32, %c0_i32_0 : i32, i32
  }
  func.func @transform_6(%arg0: i32) -> (i32, i32) {
    %c0_i32 = arith.constant 0 : i32
    %c0_i32_0 = arith.constant 0 : i32
    %c0_i32_1 = arith.constant 0 : i32
    return %c0_i32, %c0_i32_0 : i32, i32
  }
  func.func @transform_7(%arg0: i32) -> (i32, i32) {
    %c0_i32 = arith.constant 0 : i32
    %c0_i32_0 = arith.constant 0 : i32
    return %arg0, %c0_i32 : i32, i32
  }
}

</mosaic_0001>

<llo_original>
// kernel: tpu_custom_call.1
$region0: #{tpu_custom_call.1}
  #allocation0 [shape = 'u32[]', space=smem, size = 0x4, offset = 0x4, fixed_abs, tag = 'smem constant byte address 0x4 - core index']
  #allocation1 [shape = 'u32[144,128]{1,0:T(1,128)}', space=vmem, size = 0x12000, scoped, tag = 'internal scratch']
  %s0 = inlined_call_operand.hbm [shape: bf16[16,16], index: 0, kind: input, shape index: {}]
  %s1 = inlined_call_operand.hbm [shape: bf16[16,256], index: 1, kind: input, shape index: {}]
  %s2 = inlined_call_operand.vmem [shape: f32[1,256], index: 2, kind: input, shape index: {}]
  %s3 = inlined_call_operand.hbm [shape: bf16[256,256], index: 3, kind: input, shape index: {}]
  %s4 = inlined_call_operand.vmem [shape: f32[1,256], index: 4, kind: input, shape index: {}]
  %s5 = inlined_call_operand.hbm [shape: bf16[256,128], index: 5, kind: input, shape index: {}]
  %s6 = inlined_call_operand.vmem [shape: f32[1,128], index: 6, kind: input, shape index: {}]
  %s7 = inlined_call_operand.hbm [shape: f32[16,128], index: 7, kind: output, shape index: {}]
  %s8 = sld [smem:[#allocation0]]
  $region54: #{tpu_custom_call.1} parent=0
    _
  %s10 = ssub.s32 1, %s8
  %s11 = scalar_select 0, %s10, %s8
  $region1: #{tpu_custom_call.1} parent=0
    #allocation2 [shape = 'u8[4096]{0}', space=vmem, size = 0x1000, scoped, tag = 'input window, operand 0, single buffered']
    #allocation3 [shape = 's32[1]{0}', space=sflag, size = 0x4, scoped, tag = 'scoped memory for tpu_custom_call.1']
    #allocation4 [shape = 's32[1]{0}', space=sflag, size = 0x4, scoped, tag = 'scoped memory for tpu_custom_call.1']
    #allocation5 [shape = 'u8[8192]{0}', space=vmem, size = 0x2000, scoped, tag = 'input window, operand 1, single buffered']
    #allocation6 [shape = 's32[1]{0}', space=sflag, size = 0x4, scoped, tag = 'scoped memory for tpu_custom_call.1']
    #allocation7 [shape = 'u8[131072]{0}', space=vmem, size = 0x20000, scoped, tag = 'input window, operand 3, single buffered']
    #allocation8 [shape = 'u8[65536]{0}', space=vmem, size = 0x10000, scoped, tag = 'input window, operand 5, single buffered']
    #allocation9 [shape = 's32[1]{0}', space=sflag, size = 0x4, scoped, tag = 'scoped memory for tpu_custom_call.1']
    #allocation10 [shape = 'u8[8192]{0}', space=vmem, size = 0x2000, scoped, tag = 'output window, operand 0, single buffered']
    %12 = vsyncpa [#allocation3], 0
    %13 = vsyncpa [#allocation6], 0
    %14 = vsyncpa [#allocation9], 0
    %15 = vsyncpa [#allocation4], 0
    // Predicated region
    $region2: #{tpu_custom_call.1} parent=1 // pred_check
      _
    $region3: #{tpu_custom_call.1} parent=1 // pred_check_branch
      %17 = sbr.rel (0) target = $region5
    $region4: #{tpu_custom_call.1} parent=1 // pred_region
      %s19 = ssub.s32 128, 128
      %20 = vsyncadd [#allocation3], %s19
      %s21 = sshll.u32 [#allocation2], 4
      %s22 = int_to_ptr.vmem [resolvable:$true] %s21
      %27 = dma.hbm_to_vmem [thread:$0]  %s0, 128, %s22, [#allocation3], 64, 64, 4
    $region5: #{tpu_custom_call.1} parent=1 // pred_fallthru
      _
    // Predicated region
    $region6: #{tpu_custom_call.1} parent=1 // pred_check
      _
    $region7: #{tpu_custom_call.1} parent=1 // pred_check_branch
      %29 = sbr.rel (0) target = $region9
    $region8: #{tpu_custom_call.1} parent=1 // pred_region
      %s31 = ssub.s32 256, 256
      %32 = vsyncadd [#allocation6], %s31
      %s33 = sshll.u32 [#allocation5], 4
      %s34 = int_to_ptr.vmem [resolvable:$true] %s33
      %39 = dma.hbm_to_vmem [thread:$0]  %s1, 256, %s34, [#allocation6], 128, 128, 8
    $region9: #{tpu_custom_call.1} parent=1 // pred_fallthru
      _
    // Predicated region
    $region10: #{tpu_custom_call.1} parent=1 // pred_check
      _
    $region11: #{tpu_custom_call.1} parent=1 // pred_check_branch
      %41 = sbr.rel (0) target = $region13
    $region12: #{tpu_custom_call.1} parent=1 // pred_region
      _
    $region13: #{tpu_custom_call.1} parent=1 // pred_fallthru
      _
    // Predicated region
    $region14: #{tpu_custom_call.1} parent=1 // pred_check
      _
    $region15: #{tpu_custom_call.1} parent=1 // pred_check_branch
      %43 = sbr.rel (0) target = $region17
    $region16: #{tpu_custom_call.1} parent=1 // pred_region
      %s45 = ssub.s32 4096, 4096
      %46 = vsyncadd [#allocation6], %s45
      %s47 = sshll.u32 [#allocation7], 4
      %s48 = int_to_ptr.vmem [resolvable:$true] %s47
      %53 = dma.hbm_to_vmem [thread:$0]  %s3, 4096, %s48, [#allocation6], 128, 128, 8
    $region17: #{tpu_custom_call.1} parent=1 // pred_fallthru
      _
    // Predicated region
    $region18: #{tpu_custom_call.1} parent=1 // pred_check
      _
    $region19: #{tpu_custom_call.1} parent=1 // pred_check_branch
      %55 = sbr.rel (0) target = $region21
    $region20: #{tpu_custom_call.1} parent=1 // pred_region
      _
    $region21: #{tpu_custom_call.1} parent=1 // pred_fallthru
      _
    // Predicated region
    $region22: #{tpu_custom_call.1} parent=1 // pred_check
      _
    $region23: #{tpu_custom_call.1} parent=1 // pred_check_branch
      %57 = sbr.rel (0) target = $region25
    $region24: #{tpu_custom_call.1} parent=1 // pred_region
      %s59 = ssub.s32 2048, 2048
      %60 = vsyncadd [#allocation9], %s59
      %s61 = sshll.u32 [#allocation8], 4
      %s62 = int_to_ptr.vmem [resolvable:$true] %s61
      %67 = dma.hbm_to_vmem [thread:$0]  %s5, 2048, %s62, [#allocation9], 64, 64, 4
    $region25: #{tpu_custom_call.1} parent=1 // pred_fallthru
      _
    // Predicated region
    $region26: #{tpu_custom_call.1} parent=1 // pred_check
      _
    $region27: #{tpu_custom_call.1} parent=1 // pred_check_branch
      %69 = sbr.rel (0) target = $region29
    $region28: #{tpu_custom_call.1} parent=1 // pred_region
      _
    $region29: #{tpu_custom_call.1} parent=1 // pred_fallthru
      _
    // Predicated region
    $region30: #{tpu_custom_call.1} parent=1 // pred_check
      _
    $region31: #{tpu_custom_call.1} parent=1 // pred_check_branch
      %71 = sbr.rel (0) target = $region33
    $region32: #{tpu_custom_call.1} parent=1 // pred_region
      %72 = dma.done [#allocation3], 128
    $region33: #{tpu_custom_call.1} parent=1 // pred_fallthru
      _
    // Predicated region
    $region34: #{tpu_custom_call.1} parent=1 // pred_check
      _
    $region35: #{tpu_custom_call.1} parent=1 // pred_check_branch
      %74 = sbr.rel (0) target = $region37
    $region36: #{tpu_custom_call.1} parent=1 // pred_region
      %75 = dma.done [#allocation6], 256
    $region37: #{tpu_custom_call.1} parent=1 // pred_fallthru
      _
    // Predicated region
    $region38: #{tpu_custom_call.1} parent=1 // pred_check
      _
    $region39: #{tpu_custom_call.1} parent=1 // pred_check_branch
      %77 = sbr.rel (0) target = $region41
    $region40: #{tpu_custom_call.1} parent=1 // pred_region
      %78 = dma.done [#allocation6], 4096
    $region41: #{tpu_custom_call.1} parent=1 // pred_fallthru
      _
    // Predicated region
    $region42: #{tpu_custom_call.1} parent=1 // pred_check
      _
    $region43: #{tpu_custom_call.1} parent=1 // pred_check_branch
      %80 = sbr.rel (0) target = $region45
    $region44: #{tpu_custom_call.1} parent=1 // pred_region
      %81 = dma.done [#allocation9], 2048
    $region45: #{tpu_custom_call.1} parent=1 // pred_fallthru
      _
    %v83 = vld [vmem:[#allocation2] sm:$0xf]
    %v84 = vld [vmem:[#allocation2 + $0x4] sm:$0xf]
    %v85 = vld [vmem:[#allocation5] sm:$0xff]
    %v86 = vld [vmem:[#allocation5 + $0x8] sm:$0xff]
    %v87 = vld [vmem:[%s2] sm:$0x3]
    %v89 = vlaneseq
    %v90 = vshrl.u32 %v89, 7
    %v91 = vsub.s32 0, %v90
    %v92 = vrot.slane %v87, %v91
    %v93 = vlaneseq
    %v94 = vshrl.u32 %v93, 7
    %v95 = vsub.s32 1, %v94
    %v96 = vrot.slane %v87, %v95
    %v101 = vunpack.c.l.b16 %v83
    %v102 = vunpack.c.l.b16 %v84
    %v103 = vpack.c.b16 %v102, %v101
    %v106 = vunpack.c.l.b16 %v85
    %v107 = vunpack.c.h.b16 %v85
    %v108 = vunpack.c.l.b16 %v86
    %v109 = vunpack.c.h.b16 %v86
    %v110 = vpack.c.b16 %v108, %v106
    %v111 = vpack.c.b16 %v109, %v107
    %vm114 = vcmask 130048
    %v116 = vsel %vm114, %v103, 0
    %118 = vmatprep.subr.bf16.mxu0 %v111
    %119 = vmatpush1.bf16.msra.mxu0 %v110
    %120 = vmatprep.subr.bf16.mxu0 0
    %121 = vmatpush1.bf16.msra.mxu0 0
    %122 = vmatprep.subr.bf16.mxu0 0
    %123 = vmatpush1.bf16.msra.mxu0 0
    %124 = vmatprep.subr.bf16.mxu0 0
    %125 = vmatpush1.bf16.msra.mxu0 0
    %126 = vmatprep.subr.bf16.mxu0 0
    %127 = vmatpush1.bf16.msra.mxu0 0
    %128 = vmatprep.subr.bf16.mxu0 0
    %129 = vmatpush1.bf16.msra.mxu0 0
    %130 = vmatprep.subr.bf16.mxu0 0
    %131 = vmatpush1.bf16.msra.mxu0 0
    %132 = vmatprep.subr.bf16.mxu0 0
    %133 = vmatpush1.bf16.msra.mxu0 0
    %134 = vmatprep.subr.bf16.mxu0 0
    %135 = vmatpush1.bf16.msra.mxu0 0
    %136 = vmatprep.subr.bf16.mxu0 0
    %137 = vmatpush1.bf16.msra.mxu0 0
    %138 = vmatprep.subr.bf16.mxu0 0
    %139 = vmatpush1.bf16.msra.mxu0 0
    %140 = vmatprep.subr.bf16.mxu0 0
    %141 = vmatpush1.bf16.msra.mxu0 0
    %142 = vmatprep.subr.bf16.mxu0 0
    %143 = vmatpush1.bf16.msra.mxu0 0
    %144 = vmatprep.subr.bf16.mxu0 0
    %145 = vmatpush1.bf16.msra.mxu0 0
    %146 = vmatprep.subr.bf16.mxu0 0
    %147 = vmatpush1.bf16.msra.mxu0 0
    %148 = vmatprep.subr.bf16.mxu0 0
    %149 = vmatpush1.bf16.msra.mxu0 0
    %150 = vmatprep.mubr.bf16.mxu0 0
    %151 = vmatmul.mubr.bf16.gmra.mrb[0].mxu0 %v116
    %v152 = vpop.f32.mrb[0].mxu0
    %v153 = vadd.f32 %v92, %v152
    %v154 = vpop.f32.mrb[0].mxu0
    %v155 = vadd.f32 %v96, %v154
    %v156 = vpop.f32.mrb[0].mxu0
    %v157 = vadd.f32 %v92, %v156
    %v158 = vpop.f32.mrb[0].mxu0
    %v159 = vadd.f32 %v96, %v158
    %160 = vdwg.mxu0
    %v161 = vmax.f32 %v153, 0.0
    %v162 = vmax.f32 %v155, 0.0
    %v163 = vmax.f32 %v157, 0.0
    %v164 = vmax.f32 %v159, 0.0
    %v165 = vpack.c.bf16 %v163, %v161
    %v166 = vpack.c.bf16 %v164, %v162
    %v167 = vld [vmem:[#allocation7] sm:$0xff]
    %v168 = vld [vmem:[#allocation7 + $0x8] sm:$0xff]
    %v169 = vld [vmem:[#allocation7 + $0x10] sm:$0xff]
    %v170 = vld [vmem:[#allocation7 + $0x18] sm:$0xff]
    %v171 = vld [vmem:[#allocation7 + $0x20] sm:$0xff]
    %v172 = vld [vmem:[#allocation7 + $0x28] sm:$0xff]
    %v173 = vld [vmem:[#allocation7 + $0x30] sm:$0xff]
    %v174 = vld [vmem:[#allocation7 + $0x38] sm:$0xff]
    %v175 = vld [vmem:[#allocation7 + $0x40] sm:$0xff]
    %v176 = vld [vmem:[#allocation7 + $0x48] sm:$0xff]
    %v177 = vld [vmem:[#allocation7 + $0x50] sm:$0xff]
    %v178 = vld [vmem:[#allocation7 + $0x58] sm:$0xff]
    %v179 = vld [vmem:[#allocation7 + $0x60] sm:$0xff]
    %v180 = vld [vmem:[#allocation7 + $0x68] sm:$0xff]
    %v181 = vld [vmem:[#allocation7 + $0x70] sm:$0xff]
    %v182 = vld [vmem:[#allocation7 + $0x78] sm:$0xff]
    %v183 = vld [vmem:[#allocation7 + $0x80] sm:$0xff]
    %v184 = vld [vmem:[#allocation7 + $0x88] sm:$0xff]
    %v185 = vld [vmem:[#allocation7 + $0x90] sm:$0xff]
    %v186 = vld [vmem:[#allocation7 + $0x98] sm:$0xff]
    %v187 = vld [vmem:[#allocation7 + $0xa0] sm:$0xff]
    %v188 = vld [vmem:[#allocation7 + $0xa8] sm:$0xff]
    %v189 = vld [vmem:[#allocation7 + $0xb0] sm:$0xff]
    %v190 = vld [vmem:[#allocation7 + $0xb8] sm:$0xff]
    %v191 = vld [vmem:[#allocation7 + $0xc0] sm:$0xff]
    %v192 = vld [vmem:[#allocation7 + $0xc8] sm:$0xff]
    %v193 = vld [vmem:[#allocation7 + $0xd0] sm:$0xff]
    %v194 = vld [vmem:[#allocation7 + $0xd8] sm:$0xff]
    %v195 = vld [vmem:[#allocation7 + $0xe0] sm:$0xff]
    %v196 = vld [vmem:[#allocation7 + $0xe8] sm:$0xff]
    %v197 = vld [vmem:[#allocation7 + $0xf0] sm:$0xff]
    %v198 = vld [vmem:[#allocation7 + $0xf8] sm:$0xff]
    %v199 = vld [vmem:[%s4] sm:$0x3]
    %v201 = vlaneseq
    %v202 = vshrl.u32 %v201, 7
    %v203 = vsub.s32 0, %v202
    %v204 = vrot.slane %v199, %v203
    %v205 = vlaneseq
    %v206 = vshrl.u32 %v205, 7
    %v207 = vsub.s32 1, %v206
    %v208 = vrot.slane %v199, %v207
    %v243 = vunpack.c.l.b16 %v167
    %v244 = vunpack.c.h.b16 %v167
    %v245 = vunpack.c.l.b16 %v168
    %v246 = vunpack.c.h.b16 %v168
    %v247 = vunpack.c.l.b16 %v169
    %v248 = vunpack.c.h.b16 %v169
    %v249 = vunpack.c.l.b16 %v170
    %v250 = vunpack.c.h.b16 %v170
    %v251 = vunpack.c.l.b16 %v171
    %v252 = vunpack.c.h.b16 %v171
    %v253 = vunpack.c.l.b16 %v172
    %v254 = vunpack.c.h.b16 %v172
    %v255 = vunpack.c.l.b16 %v173
    %v256 = vunpack.c.h.b16 %v173
    %v257 = vunpack.c.l.b16 %v174
    %v258 = vunpack.c.h.b16 %v174
    %v259 = vunpack.c.l.b16 %v175
    %v260 = vunpack.c.h.b16 %v175
    %v261 = vunpack.c.l.b16 %v176
    %v262 = vunpack.c.h.b16 %v176
    %v263 = vunpack.c.l.b16 %v177
    %v264 = vunpack.c.h.b16 %v177
    %v265 = vunpack.c.l.b16 %v178
    %v266 = vunpack.c.h.b16 %v178
    %v267 = vunpack.c.l.b16 %v179
    %v268 = vunpack.c.h.b16 %v179
    %v269 = vunpack.c.l.b16 %v180
    %v270 = vunpack.c.h.b16 %v180
    %v271 = vunpack.c.l.b16 %v181
    %v272 = vunpack.c.h.b16 %v181
    %v273 = vunpack.c.l.b16 %v182
    %v274 = vunpack.c.h.b16 %v182
    %v275 = vunpack.c.l.b16 %v183
    %v276 = vunpack.c.h.b16 %v183
    %v277 = vunpack.c.l.b16 %v184
    %v278 = vunpack.c.h.b16 %v184
    %v279 = vunpack.c.l.b16 %v185
    %v280 = vunpack.c.h.b16 %v185
    %v281 = vunpack.c.l.b16 %v186
    %v282 = vunpack.c.h.b16 %v186
    %v283 = vunpack.c.l.b16 %v187
    %v284 = vunpack.c.h.b16 %v187
    %v285 = vunpack.c.l.b16 %v188
    %v286 = vunpack.c.h.b16 %v188
    %v287 = vunpack.c.l.b16 %v189
    %v288 = vunpack.c.h.b16 %v189
    %v289 = vunpack.c.l.b16 %v190
    %v290 = vunpack.c.h.b16 %v190
    %v291 = vunpack.c.l.b16 %v191
    %v292 = vunpack.c.h.b16 %v191
    %v293 = vunpack.c.l.b16 %v192
    %v294 = vunpack.c.h.b16 %v192
    %v295 = vunpack.c.l.b16 %v193
    %v296 = vunpack.c.h.b16 %v193
    %v297 = vunpack.c.l.b16 %v194
    %v298 = vunpack.c.h.b16 %v194
    %v299 = vunpack.c.l.b16 %v195
    %v300 = vunpack.c.h.b16 %v195
    %v301 = vunpack.c.l.b16 %v196
    %v302 = vunpack.c.h.b16 %v196
    %v303 = vunpack.c.l.b16 %v197
    %v304 = vunpack.c.h.b16 %v197
    %v305 = vunpack.c.l.b16 %v198
    %v306 = vunpack.c.h.b16 %v198
    %v307 = vpack.c.b16 %v245, %v243
    %v308 = vpack.c.b16 %v246, %v244
    %v309 = vpack.c.b16 %v249, %v247
    %v310 = vpack.c.b16 %v250, %v248
    %v311 = vpack.c.b16 %v253, %v251
    %v312 = vpack.c.b16 %v254, %v252
    %v313 = vpack.c.b16 %v257, %v255
    %v314 = vpack.c.b16 %v258, %v256
    %v315 = vpack.c.b16 %v261, %v259
    %v316 = vpack.c.b16 %v262, %v260
    %v317 = vpack.c.b16 %v265, %v263
    %v318 = vpack.c.b16 %v266, %v264
    %v319 = vpack.c.b16 %v269, %v267
    %v320 = vpack.c.b16 %v270, %v268
    %v321 = vpack.c.b16 %v273, %v271
    %v322 = vpack.c.b16 %v274, %v272
    %v323 = vpack.c.b16 %v277, %v275
    %v324 = vpack.c.b16 %v278, %v276
    %v325 = vpack.c.b16 %v281, %v279
    %v326 = vpack.c.b16 %v282, %v280
    %v327 = vpack.c.b16 %v285, %v283
    %v328 = vpack.c.b16 %v286, %v284
    %v329 = vpack.c.b16 %v289, %v287
    %v330 = vpack.c.b16 %v290, %v288
    %v331 = vpack.c.b16 %v293, %v291
    %v332 = vpack.c.b16 %v294, %v292
    %v333 = vpack.c.b16 %v297, %v295
    %v334 = vpack.c.b16 %v298, %v296
    %v335 = vpack.c.b16 %v301, %v299
    %v336 = vpack.c.b16 %v302, %v300
    %v337 = vpack.c.b16 %v305, %v303
    %v338 = vpack.c.b16 %v306, %v304
    %371 = vmatprep.subr.bf16.mxu0 %v308
    %372 = vmatpush1.bf16.msra.mxu0 %v307
    %373 = vmatprep.subr.bf16.mxu0 %v310
    %374 = vmatpush1.bf16.msra.mxu0 %v309
    %375 = vmatprep.subr.bf16.mxu0 %v312
    %376 = vmatpush1.bf16.msra.mxu0 %v311
    %377 = vmatprep.subr.bf16.mxu0 %v314
    %378 = vmatpush1.bf16.msra.mxu0 %v313
    %379 = vmatprep.subr.bf16.mxu0 %v316
    %380 = vmatpush1.bf16.msra.mxu0 %v315
    %381 = vmatprep.subr.bf16.mxu0 %v318
    %382 = vmatpush1.bf16.msra.mxu0 %v317
    %383 = vmatprep.subr.bf16.mxu0 %v320
    %384 = vmatpush1.bf16.msra.mxu0 %v319
    %385 = vmatprep.subr.bf16.mxu0 %v322
    %386 = vmatpush1.bf16.msra.mxu0 %v321
    %387 = vmatprep.subr.bf16.mxu0 %v324
    %388 = vmatpush1.bf16.msra.mxu0 %v323
    %389 = vmatprep.subr.bf16.mxu0 %v326
    %390 = vmatpush1.bf16.msra.mxu0 %v325
    %391 = vmatprep.subr.bf16.mxu0 %v328
    %392 = vmatpush1.bf16.msra.mxu0 %v327
    %393 = vmatprep.subr.bf16.mxu0 %v330
    %394 = vmatpush1.bf16.msra.mxu0 %v329
    %395 = vmatprep.subr.bf16.mxu0 %v332
    %396 = vmatpush1.bf16.msra.mxu0 %v331
    %397 = vmatprep.subr.bf16.mxu0 %v334
    %398 = vmatpush1.bf16.msra.mxu0 %v333
    %399 = vmatprep.subr.bf16.mxu0 %v336
    %400 = vmatpush1.bf16.msra.mxu0 %v335
    %401 = vmatprep.subr.bf16.mxu0 %v338
    %402 = vmatpush1.bf16.msra.mxu0 %v337
    %403 = vmatprep.mubr.bf16.mxu0 %v166
    %404 = vmatmul.mubr.bf16.gmra.mrb[0].mxu0 %v165
    %v405 = vpop.f32.mrb[0].mxu0
    %v406 = vadd.f32 %v204, %v405
    %v407 = vpop.f32.mrb[0].mxu0
    %v408 = vadd.f32 %v208, %v407
    %v409 = vpop.f32.mrb[0].mxu0
    %v410 = vadd.f32 %v204, %v409
    %v411 = vpop.f32.mrb[0].mxu0
    %v412 = vadd.f32 %v208, %v411
    %413 = vdwg.mxu0
    %v414 = vmax.f32 %v406, 0.0
    %v415 = vmax.f32 %v408, 0.0
    %v416 = vmax.f32 %v410, 0.0
    %v417 = vmax.f32 %v412, 0.0
    %v418 = vpack.c.bf16 %v416, %v414
    %v419 = vpack.c.bf16 %v417, %v415
    %v420 = vld [vmem:[#allocation8] sm:$0xf]
    %v421 = vld [vmem:[#allocation8 + $0x4] sm:$0xf]
    %v422 = vld [vmem:[#allocation8 + $0x8] sm:$0xf]
    %v423 = vld [vmem:[#allocation8 + $0xc] sm:$0xf]
    %v424 = vld [vmem:[#allocation8 + $0x10] sm:$0xf]
    %v425 = vld [vmem:[#allocation8 + $0x14] sm:$0xf]
    %v426 = vld [vmem:[#allocation8 + $0x18] sm:$0xf]
    %v427 = vld [vmem:[#allocation8 + $0x1c] sm:$0xf]
    %v428 = vld [vmem:[#allocation8 + $0x20] sm:$0xf]
    %v429 = vld [vmem:[#allocation8 + $0x24] sm:$0xf]
    %v430 = vld [vmem:[#allocation8 + $0x28] sm:$0xf]
    %v431 = vld [vmem:[#allocation8 + $0x2c] sm:$0xf]
    %v432 = vld [vmem:[#allocation8 + $0x30] sm:$0xf]
    %v433 = vld [vmem:[#allocation8 + $0x34] sm:$0xf]
    %v434 = vld [vmem:[#allocation8 + $0x38] sm:$0xf]
    %v435 = vld [vmem:[#allocation8 + $0x3c] sm:$0xf]
    %v436 = vld [vmem:[#allocation8 + $0x40] sm:$0xf]
    %v437 = vld [vmem:[#allocation8 + $0x44] sm:$0xf]
    %v438 = vld [vmem:[#allocation8 + $0x48] sm:$0xf]
    %v439 = vld [vmem:[#allocation8 + $0x4c] sm:$0xf]
    %v440 = vld [vmem:[#allocation8 + $0x50] sm:$0xf]
    %v441 = vld [vmem:[#allocation8 + $0x54] sm:$0xf]
    %v442 = vld [vmem:[#allocation8 + $0x58] sm:$0xf]
    %v443 = vld [vmem:[#allocation8 + $0x5c] sm:$0xf]
    %v444 = vld [vmem:[#allocation8 + $0x60] sm:$0xf]
    %v445 = vld [vmem:[#allocation8 + $0x64] sm:$0xf]
    %v446 = vld [vmem:[#allocation8 + $0x68] sm:$0xf]
    %v447 = vld [vmem:[#allocation8 + $0x6c] sm:$0xf]
    %v448 = vld [vmem:[#allocation8 + $0x70] sm:$0xf]
    %v449 = vld [vmem:[#allocation8 + $0x74] sm:$0xf]
    %v450 = vld [vmem:[#allocation8 + $0x78] sm:$0xf]
    %v451 = vld [vmem:[#allocation8 + $0x7c] sm:$0xf]
    %v452 = vld [vmem:[%s6] sm:$0x1]
    %v454 = vlaneseq
    %v455 = vshrl.u32 %v454, 7
    %v456 = vsub.s32 0, %v455
    %v457 = vrot.slane %v452, %v456
    %v491 = vunpack.c.l.b16 %v420
    %v492 = vunpack.c.l.b16 %v421
    %v493 = vunpack.c.l.b16 %v422
    %v494 = vunpack.c.l.b16 %v423
    %v495 = vunpack.c.l.b16 %v424
    %v496 = vunpack.c.l.b16 %v425
    %v497 = vunpack.c.l.b16 %v426
    %v498 = vunpack.c.l.b16 %v427
    %v499 = vunpack.c.l.b16 %v428
    %v500 = vunpack.c.l.b16 %v429
    %v501 = vunpack.c.l.b16 %v430
    %v502 = vunpack.c.l.b16 %v431
    %v503 = vunpack.c.l.b16 %v432
    %v504 = vunpack.c.l.b16 %v433
    %v505 = vunpack.c.l.b16 %v434
    %v506 = vunpack.c.l.b16 %v435
    %v507 = vunpack.c.l.b16 %v436
    %v508 = vunpack.c.l.b16 %v437
    %v509 = vunpack.c.l.b16 %v438
    %v510 = vunpack.c.l.b16 %v439
    %v511 = vunpack.c.l.b16 %v440
    %v512 = vunpack.c.l.b16 %v441
    %v513 = vunpack.c.l.b16 %v442
    %v514 = vunpack.c.l.b16 %v443
    %v515 = vunpack.c.l.b16 %v444
    %v516 = vunpack.c.l.b16 %v445
    %v517 = vunpack.c.l.b16 %v446
    %v518 = vunpack.c.l.b16 %v447
    %v519 = vunpack.c.l.b16 %v448
    %v520 = vunpack.c.l.b16 %v449
    %v521 = vunpack.c.l.b16 %v450
    %v522 = vunpack.c.l.b16 %v451
    %v523 = vpack.c.b16 %v492, %v491
    %v524 = vpack.c.b16 %v494, %v493
    %v525 = vpack.c.b16 %v496, %v495
    %v526 = vpack.c.b16 %v498, %v497
    %v527 = vpack.c.b16 %v500, %v499
    %v528 = vpack.c.b16 %v502, %v501
    %v529 = vpack.c.b16 %v504, %v503
    %v530 = vpack.c.b16 %v506, %v505
    %v531 = vpack.c.b16 %v508, %v507
    %v532 = vpack.c.b16 %v510, %v509
    %v533 = vpack.c.b16 %v512, %v511
    %v534 = vpack.c.b16 %v514, %v513
    %v535 = vpack.c.b16 %v516, %v515
    %v536 = vpack.c.b16 %v518, %v517
    %v537 = vpack.c.b16 %v520, %v519
    %v538 = vpack.c.b16 %v522, %v521
    %555 = vmatprep.subr.bf16.mxu0 0
    %556 = vmatpush1.bf16.msra.mxu0 %v523
    %557 = vmatprep.subr.bf16.mxu0 0
    %558 = vmatpush1.bf16.msra.mxu0 %v524
    %559 = vmatprep.subr.bf16.mxu0 0
    %560 = vmatpush1.bf16.msra.mxu0 %v525
    %561 = vmatprep.subr.bf16.mxu0 0
    %562 = vmatpush1.bf16.msra.mxu0 %v526
    %563 = vmatprep.subr.bf16.mxu0 0
    %564 = vmatpush1.bf16.msra.mxu0 %v527
    %565 = vmatprep.subr.bf16.mxu0 0
    %566 = vmatpush1.bf16.msra.mxu0 %v528
    %567 = vmatprep.subr.bf16.mxu0 0
    %568 = vmatpush1.bf16.msra.mxu0 %v529
    %569 = vmatprep.subr.bf16.mxu0 0
    %570 = vmatpush1.bf16.msra.mxu0 %v530
    %571 = vmatprep.subr.bf16.mxu0 0
    %572 = vmatpush1.bf16.msra.mxu0 %v531
    %573 = vmatprep.subr.bf16.mxu0 0
    %574 = vmatpush1.bf16.msra.mxu0 %v532
    %575 = vmatprep.subr.bf16.mxu0 0
    %576 = vmatpush1.bf16.msra.mxu0 %v533
    %577 = vmatprep.subr.bf16.mxu0 0
    %578 = vmatpush1.bf16.msra.mxu0 %v534
    %579 = vmatprep.subr.bf16.mxu0 0
    %580 = vmatpush1.bf16.msra.mxu0 %v535
    %581 = vmatprep.subr.bf16.mxu0 0
    %582 = vmatpush1.bf16.msra.mxu0 %v536
    %583 = vmatprep.subr.bf16.mxu0 0
    %584 = vmatpush1.bf16.msra.mxu0 %v537
    %585 = vmatprep.subr.bf16.mxu0 0
    %586 = vmatpush1.bf16.msra.mxu0 %v538
    %587 = vmatprep.mubr.bf16.mxu0 %v419
    %588 = vmatmul.mubr.bf16.gmra.mrb[0].mxu0 %v418
    %v589 = vpop.f32.mrb[0].mxu0
    %v590 = vadd.f32 %v457, %v589
    %v591 = vpop.f32.mrb[0].mxu0
    %v592 = vpop.f32.mrb[0].mxu0
    %v593 = vadd.f32 %v457, %v592
    %v594 = vpop.f32.mrb[0].mxu0
    %595 = vdwg.mxu0
    %v596 = vlaneseq
    %v597 = vand.u32 %v596, 127
    %vm598 = vcmp.ge.s32.totalorder %v597, 4
    %vm599 = vcmp.lt.s32.totalorder %v597, 8
    %vm600 = vmand %vm598, %vm599
    %v601 = vmax.f32 %v590, -20.0
    %v602 = vmax.f32 %v593, -20.0
    %v603 = vmin.f32 %v601, 2.0
    %v604 = vmin.f32 %v602, 2.0
    %v605 = vsel %vm600, %v603, %v590
    %v606 = vsel %vm600, %v604, %v593
    %607 = vst [vmem:[#allocation10] sm:$0xff] %v605
    %608 = vst [vmem:[#allocation10 + $0x8] sm:$0xff] %v606
    // Predicated region
    $region46: #{tpu_custom_call.1} parent=1 // pred_check
      _
    $region47: #{tpu_custom_call.1} parent=1 // pred_check_branch
      %610 = sbr.rel (0) target = $region49
    $region48: #{tpu_custom_call.1} parent=1 // pred_region
      %s612 = ssub.s32 256, 256
      %613 = vsyncadd [#allocation4], %s612
      %s614 = sshll.u32 [#allocation10], 4
      %s615 = int_to_ptr.vmem [resolvable:$true] %s614
      %620 = dma.vmem_to_hbm [thread:$0]  %s615, 256, %s7, [#allocation4], 128, 128, 8
    $region49: #{tpu_custom_call.1} parent=1 // pred_fallthru
      _
    // Predicated region
    $region50: #{tpu_custom_call.1} parent=1 // pred_check
      _
    $region51: #{tpu_custom_call.1} parent=1 // pred_check_branch
      %622 = sbr.rel (0) target = $region53
    $region52: #{tpu_custom_call.1} parent=1 // pred_region
      %623 = dma.done [#allocation4], 256
    $region53: #{tpu_custom_call.1} parent=1 // pred_fallthru
      _
    %624 = vsyncpa [#allocation3], 1
    %625 = vsyncpa [#allocation6], 1
    %626 = vsyncpa [#allocation9], 1
    %627 = vsyncpa [#allocation4], 1

</llo_original>
